<compile_context>
chip_gen: v7x
topology: tpu7x:2x2x1
jax: 0.10.0
libtpu: 0.0.40
codegen_flags: <defaults>
</compile_context>

<pallas_src>
import functools

import jax
import jax.numpy as jnp
from jax.experimental import pallas as pl
from jax.experimental.pallas import tpu as pltpu


# ------------------------------------------------------------------
# Kernel: fused 1x1 conv (BN-folded weight) + bias.
#   x_ref : (1, Cin,  T)  f32    -- spatial tile on the lane axis, cast to bf16 in-kernel
#   w_ref : (Cout, Cin)   bf16   -- BN scale folded in
#   b_ref : (Cout, 1)     f32    -- BN shift
#   o_ref : (1, Cout, T)  f32/bf16
# ------------------------------------------------------------------
def conv1x1_bn_kernel(x_ref, w_ref, b_ref, o_ref):
    x_bf16 = x_ref[0].astype(jnp.bfloat16)                       # VMEM-local cast (VPU)
    o_ref[0] = (
        jnp.dot(w_ref[...], x_bf16, preferred_element_type=jnp.float32)
        + b_ref[...]
    ).astype(o_ref.dtype)


def _round_up(x, m):
    return (x + m - 1) // m * m


def _choose_spatial_tile(hw, cin, cout, n_batch, in_bytes, out_bytes,
                         target_step_bytes=1 << 20,
                         vmem_budget_bytes=20 << 20):
    """Lane-dense (multiple-of-128) spatial tile.

    Big enough to amortize the ~0.35us per-grid-step overhead, small enough that the
    double-buffered x/out blocks plus the f32 matmul accumulator fit well inside the
    smallest per-generation VMEM (v7x: 64 MiB physical / 32 MiB default scoped).
    """
    cin_p = max(8, _round_up(cin, 8))      # sublane padding of the f32 x block
    cout_p = max(8, _round_up(cout, 8))

    # VMEM bytes per spatial element: 2x-buffered input + output blocks + f32 acc.
    vmem_per_elem = 2 * cin_p * in_bytes + 2 * cout_p * out_bytes + 4 * cout_p
    cap = max(128, (vmem_budget_bytes // vmem_per_elem) // 128 * 128)

    # HBM bytes per spatial element actually moved each step.
    hbm_per_elem = max(1, cin * in_bytes + cout * out_bytes)
    want = max(128, _round_up(target_step_bytes // hbm_per_elem, 128))

    hw_lane = _round_up(hw, 128)
    tile = max(128, (min(cap, want, hw_lane) // 128) * 128)

    # v7x has 2 TensorCores: keep >= 2 grid blocks total so neither core idles.
    if n_batch == 1 and tile >= hw_lane and hw_lane >= 256:
        tile = max(128, (hw_lane // 2 // 128) * 128)
    return tile


@functools.partial(jax.jit, static_argnames=("eps", "out_dtype"))
def attention_layer_forward(x_nchw, w_oihw, gamma, beta, run_mean, run_var,
                            eps=1e-5, out_dtype=jnp.float32):
    """Conv2d(in,out,1,bias=False) -> BatchNorm2d(out, affine=True) in eval mode."""
    N, Cin, H, W = x_nchw.shape
    Cout = w_oihw.shape[0]
    hw = H * W

    # Fold BN (running stats) into the conv: y = (scale*W) x + shift
    scale = gamma / jnp.sqrt(run_var + eps)                               # (Cout,)
    shift = beta - run_mean * scale                                       # (Cout,)
    w_fold = (w_oihw[:, :, 0, 0] * scale[:, None]).astype(jnp.bfloat16)   # (Cout, Cin)
    bias = shift.reshape(Cout, 1).astype(jnp.float32)                     # (Cout, 1)

    in_bytes = 4
    out_bytes = jnp.dtype(out_dtype).itemsize
    tile = _choose_spatial_tile(hw, Cin, Cout, N, in_bytes, out_bytes)
    hw_pad = pl.cdiv(hw, tile) * tile

    # Free contiguous reshape; activations stay f32 (cast happens inside the kernel).
    x = x_nchw.reshape(N, Cin, hw)
    if hw_pad != hw:
        x = jnp.pad(x, ((0, 0), (0, 0), (0, hw_pad - hw)))

    cost = pl.CostEstimate(
        flops=2 * N * Cout * Cin * hw_pad,
        transcendentals=0,
        bytes_accessed=(N * Cin * hw_pad * in_bytes            # activations
                        + Cout * Cin * 2 + Cout * 4            # folded weight + bias
                        + N * Cout * hw_pad * out_bytes),      # output writeback
    )

    out = pl.pallas_call(
        conv1x1_bn_kernel,
        grid=(N, hw_pad // tile),
        in_specs=[
            pl.BlockSpec((1, Cin, tile), lambda n, s: (n, 0, s)),
            pl.BlockSpec((Cout, Cin), lambda n, s: (0, 0)),
            pl.BlockSpec((Cout, 1), lambda n, s: (0, 0)),
        ],
        out_specs=pl.BlockSpec((1, Cout, tile), lambda n, s: (n, 0, s)),
        out_shape=jax.ShapeDtypeStruct((N, Cout, hw_pad), out_dtype),
        compiler_params=pltpu.CompilerParams(
            dimension_semantics=("parallel", "parallel"),
            vmem_limit_bytes=48 * 1024 * 1024,
        ),
        cost_estimate=cost,
    )(x, w_fold, bias)

    if hw_pad != hw:
        out = out[:, :, :hw]
    return out.reshape(N, Cout, H, W)


# ------------------------------------------------------------------
# Pure-JAX f32 reference (loose numerical sanity check; MXU inputs are bf16).
# ------------------------------------------------------------------
def _reference(x_nchw, w_oihw, gamma, beta, run_mean, run_var, eps=1e-5):
    y = jnp.einsum("oi,nihw->nohw", w_oihw[:, :, 0, 0], x_nchw)
    inv = 1.0 / jnp.sqrt(run_var + eps)
    y = (y - run_mean[None, :, None, None]) * (gamma * inv)[None, :, None, None]
    return y + beta[None, :, None, None]


if __name__ == "__main__":
    N, Cin, Cout = 2, 4, 8
    H, W = 16, 16

    key = jax.random.PRNGKey(0)
    kx, kw, kg, kb, km, kv = jax.random.split(key, 6)
    x = jax.random.normal(kx, (N, Cin, H, W), jnp.float32)
    w = 0.1 * jax.random.normal(kw, (Cout, Cin, 1, 1), jnp.float32)       # OIHW, 1x1
    gamma = 1.0 + 0.1 * jax.random.normal(kg, (Cout,), jnp.float32)
    beta = 0.1 * jax.random.normal(kb, (Cout,), jnp.float32)
    run_mean = 0.1 * jax.random.normal(km, (Cout,), jnp.float32)
    run_var = 1.0 + 0.1 * jax.random.uniform(kv, (Cout,), jnp.float32)

    out = attention_layer_forward(x, w, gamma, beta, run_mean, run_var)
    out = jax.block_until_ready(out)

    assert out.shape == (N, Cout, H, W), out.shape
    assert bool(jnp.all(jnp.isfinite(out)))

    ref = _reference(x, w, gamma, beta, run_mean, run_var)
    assert bool(jnp.allclose(out, ref, rtol=5e-2, atol=5e-2)), float(
        jnp.max(jnp.abs(out - ref)))

    print("KERNEL_OK")
</pallas_src>

<mosaic_0001>
module attributes {stable_mosaic.version = 11 : i64} {
  func.func @conv1x1_bn_kernel(%arg0: i32, %arg1: i32, %arg2: memref<1x4x256xf32, #tpu.memory_space<vmem>>, %arg3: memref<8x4xbf16, #tpu.memory_space<vmem>>, %arg4: memref<8x1xf32, #tpu.memory_space<vmem>>, %arg5: memref<1x8x256xf32, #tpu.memory_space<vmem>>) attributes {dimension_semantics = [#tpu.dimension_semantics<parallel>, #tpu.dimension_semantics<parallel>], iteration_bounds = array<i64: 2, 1>, scalar_prefetch = 0 : i64, scratch_operands = 0 : i64, tpu.core_type = #tpu.core_type<tc>, window_params = [{transform_indices = @transform_0, window_bounds = array<i64: 1, 4, 256>}, {pipeline_mode = #tpu.pipeline_mode<synchronous>, transform_indices = @transform_1, window_bounds = array<i64: 8, 4>}, {pipeline_mode = #tpu.pipeline_mode<synchronous>, transform_indices = @transform_2, window_bounds = array<i64: 8, 1>}, {transform_indices = @transform_3, window_bounds = array<i64: 1, 8, 256>}]} {
    %c0 = arith.constant 0 : index
    %c0_0 = arith.constant 0 : index
    %c0_1 = arith.constant 0 : index
    %0 = vector.load %arg2[%c0, %c0_0, %c0_1] : memref<1x4x256xf32, #tpu.memory_space<vmem>>, vector<1x4x256xf32>
    %1 = vector.shape_cast %0 : vector<1x4x256xf32> to vector<4x256xf32>
    %2 = arith.truncf %1 : vector<4x256xf32> to vector<4x256xbf16>
    %c0_2 = arith.constant 0 : index
    %c0_3 = arith.constant 0 : index
    %3 = vector.load %arg3[%c0_2, %c0_3] : memref<8x4xbf16, #tpu.memory_space<vmem>>, vector<8x4xbf16>
    %cst = arith.constant dense<0.000000e+00> : vector<8x256xf32>
    %4 = tpu.matmul %3, %2, %cst {dimension_numbers = #tpu.dot_dimension_numbers<[1], [0], [0], [1], [0, 0, 1, 1], [], []>} : vector<8x4xbf16>, vector<4x256xbf16>, vector<8x256xf32> -> vector<8x256xf32>
    %c0_4 = arith.constant 0 : index
    %c0_5 = arith.constant 0 : index
    %5 = vector.load %arg4[%c0_4, %c0_5] : memref<8x1xf32, #tpu.memory_space<vmem>>, vector<8x1xf32>
    %6 = vector.broadcast %5 : vector<8x1xf32> to vector<8x256xf32>
    %7 = arith.addf %4, %6 : vector<8x256xf32>
    %c0_6 = arith.constant 0 : index
    %c0_7 = arith.constant 0 : index
    %c0_8 = arith.constant 0 : index
    %8 = vector.load %arg5[%c0_6, %c0_7, %c0_8] : memref<1x8x256xf32, #tpu.memory_space<vmem>>, vector<1x8x256xf32>
    %9 = vector.shape_cast %8 : vector<1x8x256xf32> to vector<8x256xf32>
    %10 = vector.shape_cast %7 : vector<8x256xf32> to vector<1x8x256xf32>
    tpu.vector_store %arg5[%c0_6, %c0_7, %c0_8], %10 {strides = array<i32>} : memref<1x8x256xf32, #tpu.memory_space<vmem>>, vector<1x8x256xf32>,
    return
  }
  func.func @transform_0(%arg0: i32, %arg1: i32) -> (i32, i32, i32) {
    %c0_i32 = arith.constant 0 : i32
    %c0_i32_0 = arith.constant 0 : i32
    return %arg0, %c0_i32, %arg1 : i32, i32, i32
  }
  func.func @transform_1(%arg0: i32, %arg1: i32) -> (i32, i32) {
    %c0_i32 = arith.constant 0 : i32
    %c0_i32_0 = arith.constant 0 : i32
    %c0_i32_1 = arith.constant 0 : i32
    return %c0_i32, %c0_i32_0 : i32, i32
  }
  func.func @transform_2(%arg0: i32, %arg1: i32) -> (i32, i32) {
    %c0_i32 = arith.constant 0 : i32
    %c0_i32_0 = arith.constant 0 : i32
    %c0_i32_1 = arith.constant 0 : i32
    return %c0_i32, %c0_i32_0 : i32, i32
  }
  func.func @transform_3(%arg0: i32, %arg1: i32) -> (i32, i32, i32) {
    %c0_i32 = arith.constant 0 : i32
    %c0_i32_0 = arith.constant 0 : i32
    return %arg0, %c0_i32, %arg1 : i32, i32, i32
  }
}

</mosaic_0001>

<llo_original>
// kernel: attention_layer_forward.1
$region0: #{attention_layer_forward.1}
  #allocation0 [shape = 'u32[]', space=smem, size = 0x4, offset = 0x4, fixed_abs, tag = 'smem constant byte address 0x4 - core index']
  #allocation1 [shape = 'u32[144,128]{1,0:T(1,128)}', space=vmem, size = 0x12000, scoped, tag = 'internal scratch']
  %s0 = inlined_call_operand.vmem [shape: f32[2,4,256], index: 0, kind: input, shape index: {}]
  %s1 = inlined_call_operand.vmem [shape: bf16[8,4], index: 1, kind: input, shape index: {}]
  %s2 = inlined_call_operand.vmem [shape: f32[8,1], index: 2, kind: input, shape index: {}]
  %s3 = inlined_call_operand.vmem [shape: f32[2,8,256], index: 3, kind: output, shape index: {}]
  %s4 = sld [smem:[#allocation0]]
  $region45: #{attention_layer_forward.1} parent=0
    _
  %s6 = ssub.s32 1, %s4
  %s7 = scalar_select 0, %s6, %s4
  loop: start=0, step=1, limit=4
  $region2: #{attention_layer_forward.1} parent=0 // loop_pre_header
    _
  $region3: #{attention_layer_forward.1} parent=0 // loop_header
    %s9 = sphi 0, %s13
    %p10 = scmp.ge.s32.totalorder %s9, 4
    %s16 = sphi 0, %s28
    %s17 = sphi 0, %s24
    %s18 = sphi 0, %s16
    %s19 = sphi 0, %s17
    %s20 = sphi 0, %s18
    %s21 = sphi 0, %s19
    %s33 = sphi 0, %s35
    %s36 = sphi 0, %s33
    %s37 = sphi 0, %s36
    %s53 = sphi 0, %s37
    %s57 = sphi 0, %s57
    %s59 = sphi 0, %s57
    %s60 = sphi 0, %s59
    %s74 = sphi 0, %s60
    %s78 = sphi 0, %s78
    %s80 = sphi 0, %s78
    %s81 = sphi 0, %s80
    %s95 = sphi 0, %s81
    %s103 = sphi 0, %s105
    %s106 = sphi 0, %s103
    %s107 = sphi 0, %s106
    %s123 = sphi 0, %s107
  $region4: #{attention_layer_forward.1} parent=0 // loop_header_branch
    %12 = sbr.rel (%p10) target = $region8
  $region5: #{attention_layer_forward.1} parent=0 // loop_body
    %s14 = ssub.s32 %s9, 1
    %s15 = ssub.s32 %s9, 2
    %s22 = sadd.s32 1, %s17
    %p23 = scmp.ge.s32.totalorder %s22, 1
    %s24 = scalar_select %p23, 0, %s22
    %s25 = sadd.s32 1, %s16
    %s26 = scalar_select %p23, %s25, %s16
    %p27 = scmp.ge.s32.totalorder %s26, 2
    %s28 = scalar_select %p27, 0, %s26
    %s29 = ssub.s32 %s16, %s28
    %s30 = ssub.s32 %s17, %s24
    %s31 = sor.u32 %s29, %s30
    %p32 = scmp.eq.s32.totalorder %s31, 0
    %s34 = sadd.s32 %s33, 1
    %s35 = scalar_select %p32, %s33, %s34
    %p38 = pneg %p32
    %p39 = scmp.eq.s32.totalorder %s9, 1
    %p40 = por %p38, %p39
    %p41 = scmp.ne.s32.totalorder %s33, %s36
    %p42 = scmp.eq.s32.totalorder %s9, 0
    %p43 = por %p41, %p42
    %p44 = scmp.ne.s32.totalorder %s33, %s36
    %p45 = scmp.eq.s32.totalorder %s14, 1
    %p46 = por %p44, %p45
    %p47 = scmp.ne.s32.totalorder %s36, %s37
    %p48 = scmp.eq.s32.totalorder %s14, 0
    %p49 = por %p47, %p48
    %p50 = scmp.ne.s32.totalorder %s36, %s37
    %p51 = scmp.eq.s32.totalorder %s15, 1
    %p52 = por %p50, %p51
    %p54 = scmp.ne.s32.totalorder %s37, %s53
    %p55 = scmp.eq.s32.totalorder %s15, 0
    %p56 = por %p54, %p55
    %s58 = sadd.s32 %s57, 1
    %p61 = scmp.eq.s32.totalorder %s9, 1
    %p62 = scmp.ne.s32.totalorder %s57, %s59
    %p63 = scmp.eq.s32.totalorder %s9, 0
    %p64 = por %p62, %p63
    %p65 = scmp.ne.s32.totalorder %s57, %s59
    %p66 = scmp.eq.s32.totalorder %s14, 1
    %p67 = por %p65, %p66
    %p68 = scmp.ne.s32.totalorder %s59, %s60
    %p69 = scmp.eq.s32.totalorder %s14, 0
    %p70 = por %p68, %p69
    %p71 = scmp.ne.s32.totalorder %s59, %s60
    %p72 = scmp.eq.s32.totalorder %s15, 1
    %p73 = por %p71, %p72
    %p75 = scmp.ne.s32.totalorder %s60, %s74
    %p76 = scmp.eq.s32.totalorder %s15, 0
    %p77 = por %p75, %p76
    %s79 = sadd.s32 %s78, 1
    %p82 = scmp.eq.s32.totalorder %s9, 1
    %p83 = scmp.ne.s32.totalorder %s78, %s80
    %p84 = scmp.eq.s32.totalorder %s9, 0
    %p85 = por %p83, %p84
    %p86 = scmp.ne.s32.totalorder %s78, %s80
    %p87 = scmp.eq.s32.totalorder %s14, 1
    %p88 = por %p86, %p87
    %p89 = scmp.ne.s32.totalorder %s80, %s81
    %p90 = scmp.eq.s32.totalorder %s14, 0
    %p91 = por %p89, %p90
    %p92 = scmp.ne.s32.totalorder %s80, %s81
    %p93 = scmp.eq.s32.totalorder %s15, 1
    %p94 = por %p92, %p93
    %p96 = scmp.ne.s32.totalorder %s81, %s95
    %p97 = scmp.eq.s32.totalorder %s15, 0
    %p98 = por %p96, %p97
    %s99 = ssub.s32 %s16, %s28
    %s100 = ssub.s32 %s17, %s24
    %s101 = sor.u32 %s99, %s100
    %p102 = scmp.eq.s32.totalorder %s101, 0
    %s104 = sadd.s32 %s103, 1
    %s105 = scalar_select %p102, %s103, %s104
    %p108 = pneg %p102
    %p109 = scmp.eq.s32.totalorder %s9, 1
    %p110 = por %p108, %p109
    %p111 = scmp.ne.s32.totalorder %s103, %s106
    %p112 = scmp.eq.s32.totalorder %s9, 0
    %p113 = por %p111, %p112
    %p114 = scmp.ne.s32.totalorder %s103, %s106
    %p115 = scmp.eq.s32.totalorder %s14, 1
    %p116 = por %p114, %p115
    %p117 = scmp.ne.s32.totalorder %s106, %s107
    %p118 = scmp.eq.s32.totalorder %s14, 0
    %p119 = por %p117, %p118
    %p120 = scmp.ne.s32.totalorder %s106, %s107
    %p121 = scmp.eq.s32.totalorder %s15, 1
    %p122 = por %p120, %p121
    %p124 = scmp.ne.s32.totalorder %s107, %s123
    %p125 = scmp.eq.s32.totalorder %s15, 0
    %p126 = por %p124, %p125
    %p127 = scmp.le.s32.totalorder 1, %s9
    %p128 = scmp.lt.s32.totalorder %s9, 3
    %p129 = pnand %p127, %p128
    %p130 = pneg %p129
    // Predicated region
    $region9: #{attention_layer_forward.1} parent=5 // pred_check
      _
    $region10: #{attention_layer_forward.1} parent=5 // pred_check_branch
      %132 = sbr.rel (%p129) target = $region12
    $region11: #{attention_layer_forward.1} parent=5 // pred_region
      %s133 = ssub.s32 %s9, 1
      // Predicated region
      $region13: #{attention_layer_forward.1} parent=11 // pred_check
        %p134 = pneg %p70
      $region14: #{attention_layer_forward.1} parent=11 // pred_check_branch
        %136 = sbr.rel (%p134) target = $region16
      $region15: #{attention_layer_forward.1} parent=11 // pred_region
        _
      $region16: #{attention_layer_forward.1} parent=11 // pred_fallthru
        _
      // Predicated region
      $region17: #{attention_layer_forward.1} parent=11 // pred_check
        %p137 = pneg %p91
      $region18: #{attention_layer_forward.1} parent=11 // pred_check_branch
        %139 = sbr.rel (%p137) target = $region20
      $region19: #{attention_layer_forward.1} parent=11 // pred_region
        _
      $region20: #{attention_layer_forward.1} parent=11 // pred_fallthru
        _
    $region12: #{attention_layer_forward.1} parent=5 // pred_fallthru
      _
    %p140 = scmp.lt.s32.totalorder %s9, 2
    // Predicated region
    $region21: #{attention_layer_forward.1} parent=5 // pred_check
      %p141 = pneg %p140
    $region22: #{attention_layer_forward.1} parent=5 // pred_check_branch
      %143 = sbr.rel (%p141) target = $region24
    $region23: #{attention_layer_forward.1} parent=5 // pred_region
      // Predicated region
      $region25: #{attention_layer_forward.1} parent=23 // pred_check
        %p144 = pneg %p43
      $region26: #{attention_layer_forward.1} parent=23 // pred_check_branch
        %146 = sbr.rel (%p144) target = $region28
      $region27: #{attention_layer_forward.1} parent=23 // pred_region
        %s147 = smul.u32 2, %s17
        %p148 = scmp.lt.s32.totalorder %s16, 1
        %s149 = scalar_select %p148, %s16, 1
        %p150 = scmp.lt.s32.totalorder %s147, 1
        %s151 = scalar_select %p150, %s147, 1
        %s152 = smul.addr %s149, 2
        %s153 = sadd.s32 %s151, %s152
        %s154 = smul.addr %s153, 4
        %s155 = scalar_lea.vmem %s0, %s154
        %s156 = smul.u32 2, %s17
      $region28: #{attention_layer_forward.1} parent=23 // pred_fallthru
        _
    $region24: #{attention_layer_forward.1} parent=5 // pred_fallthru
      _
    %p157 = scmp.le.s32.totalorder 1, %s9
    %p158 = scmp.lt.s32.totalorder %s9, 3
    %p159 = pnand %p157, %p158
    %p160 = pneg %p159
    // Predicated region
    $region29: #{attention_layer_forward.1} parent=5 // pred_check
      _
    $region30: #{attention_layer_forward.1} parent=5 // pred_check_branch
      %162 = sbr.rel (%p159) target = $region32
    $region31: #{attention_layer_forward.1} parent=5 // pred_region
      %s163 = ssub.s32 %s9, 1
      %s164 = smul.u32 2, %s19
      %p165 = scmp.lt.s32.totalorder %s18, 1
      %s166 = scalar_select %p165, %s18, 1
      %p167 = scmp.lt.s32.totalorder %s164, 1
      %s168 = scalar_select %p167, %s164, 1
      %s169 = smul.addr %s166, 2
      %s170 = sadd.s32 %s168, %s169
      %s171 = smul.addr %s170, 4
      %s172 = scalar_lea.vmem %s0, %s171
      %p173 = pneg %p49
      %p174 = pneg %p46
      %p175 = pneg %p70
      %p176 = pneg %p67
      %p177 = pneg %p91
      %p178 = pneg %p88
      %p179 = pneg %p119
      %p180 = pneg %p116
      %s181 = smul.u32 2, %s19
      %p182 = scmp.lt.s32.totalorder %s18, 1
      %s183 = scalar_select %p182, %s18, 1
      %p184 = scmp.lt.s32.totalorder %s181, 1
      %s185 = scalar_select %p184, %s181, 1
      %s186 = smul.addr %s183, 2
      %s187 = sadd.s32 %s185, %s186
      %s188 = smul.addr %s187, 8
      %s189 = scalar_lea.vmem %s3, %s188
      %s190 = smul.u32 2, %s19
      %p191 = scmp.lt.s32.totalorder %s18, 1
      %s192 = scalar_select %p191, %s18, 1
      %p193 = scmp.lt.s32.totalorder %s190, 1
      %s194 = scalar_select %p193, %s190, 1
      %s195 = smul.addr %s192, 2
      %s196 = sadd.s32 %s194, %s195
      %s197 = smul.addr %s196, 4
      %s198 = scalar_lea.vmem %s0, %s197
      %s199 = smul.u32 2, %s19
      %s200 = smul.u32 2, %s19
      %p201 = scmp.lt.s32.totalorder %s18, 1
      %s202 = scalar_select %p201, %s18, 1
      %p203 = scmp.lt.s32.totalorder %s200, 1
      %s204 = scalar_select %p203, %s200, 1
      %s205 = smul.addr %s202, 2
      %s206 = sadd.s32 %s204, %s205
      %s207 = smul.addr %s206, 8
      %s208 = scalar_lea.vmem %s3, %s207
      %s209 = smul.u32 2, %s19
      %v211 = vld [vmem:[%s198] sm:$0xff]
      %v213 = vcombine.high %v211, %v211
      %v215 = vpack.c.bf16 %v211, %v211
      %v216 = vpack.c.bf16 %v213, %v213
      %v217 = vld [vmem:[%s1] sm:$0xf]
      %v218 = vld [vmem:[%s2] sm:$0xff]
      %220 = vset.pattern.permute.xlu0 0
      %221 = vperm.xlu0 %220, %v218
      %v222 = vpop.permute.xlu0 %221
      %vm224 = vcmask 31744
      %v226 = vsel %vm224, %v217, 0
      %vm228 = vcmask 1041408
      %v230 = vsel %vm228, %v215, 0
      %v233 = vsel %vm228, %v216, 0
      %235 = vmatprep.subr.bf16.mxu0 %v233
      %236 = vmatpush1.bf16.msra.mxu0 %v230
      %237 = vmatprep.subr.bf16.mxu0 0
      %238 = vmatpush1.bf16.msra.mxu0 0
      %239 = vmatprep.subr.bf16.mxu0 0
      %240 = vmatpush1.bf16.msra.mxu0 0
      %241 = vmatprep.subr.bf16.mxu0 0
      %242 = vmatpush1.bf16.msra.mxu0 0
      %243 = vmatprep.subr.bf16.mxu0 0
      %244 = vmatpush1.bf16.msra.mxu0 0
      %245 = vmatprep.subr.bf16.mxu0 0
      %246 = vmatpush1.bf16.msra.mxu0 0
      %247 = vmatprep.subr.bf16.mxu0 0
      %248 = vmatpush1.bf16.msra.mxu0 0
      %249 = vmatprep.subr.bf16.mxu0 0
      %250 = vmatpush1.bf16.msra.mxu0 0
      %251 = vmatprep.subr.bf16.mxu0 0
      %252 = vmatpush1.bf16.msra.mxu0 0
      %253 = vmatprep.subr.bf16.mxu0 0
      %254 = vmatpush1.bf16.msra.mxu0 0
      %255 = vmatprep.subr.bf16.mxu0 0
      %256 = vmatpush1.bf16.msra.mxu0 0
      %257 = vmatprep.subr.bf16.mxu0 0
      %258 = vmatpush1.bf16.msra.mxu0 0
      %259 = vmatprep.subr.bf16.mxu0 0
      %260 = vmatpush1.bf16.msra.mxu0 0
      %261 = vmatprep.subr.bf16.mxu0 0
      %262 = vmatpush1.bf16.msra.mxu0 0
      %263 = vmatprep.subr.bf16.mxu0 0
      %264 = vmatpush1.bf16.msra.mxu0 0
      %265 = vmatprep.subr.bf16.mxu0 0
      %266 = vmatpush1.bf16.msra.mxu0 0
      %267 = vmatprep.mubr.bf16.mxu0 0
      %268 = vmatmul.mubr.bf16.gmra.mrb[0].mxu0 %v226
      %v269 = vpop.f32.mrb[0].mxu0
      %v270 = vadd.f32 %v222, %v269
      %v271 = vpop.f32.mrb[0].mxu0
      %v272 = vadd.f32 %v222, %v271
      %v273 = vpop.f32.mrb[0].mxu0
      %v274 = vpop.f32.mrb[0].mxu0
      %275 = vdwg.mxu0
      %276 = vst [vmem:[%s208] sm:$0xff] %v270
      %277 = vst [vmem:[%s208 + $0x8] sm:$0xff] %v272
      %s278 = smul.u32 2, %s19
      %p279 = scmp.lt.s32.totalorder %s18, 1
      %s280 = scalar_select %p279, %s18, 1
      %p281 = scmp.lt.s32.totalorder %s278, 1
      %s282 = scalar_select %p281, %s278, 1
      %s283 = smul.addr %s280, 2
      %s284 = sadd.s32 %s282, %s283
      %s285 = smul.addr %s284, 8
      %s286 = scalar_lea.vmem %s3, %s285
      // Predicated region
      $region33: #{attention_layer_forward.1} parent=31 // pred_check
        %p287 = pneg %p116
      $region34: #{attention_layer_forward.1} parent=31 // pred_check_branch
        %289 = sbr.rel (%p287) target = $region36
      $region35: #{attention_layer_forward.1} parent=31 // pred_region
        %s290 = smul.u32 2, %s19
      $region36: #{attention_layer_forward.1} parent=31 // pred_fallthru
        _
    $region32: #{attention_layer_forward.1} parent=5 // pred_fallthru
      _
    %p291 = scmp.le.s32.totalorder 2, %s9
    // Predicated region
    $region37: #{attention_layer_forward.1} parent=5 // pred_check
      %p292 = pneg %p291
    $region38: #{attention_layer_forward.1} parent=5 // pred_check_branch
      %294 = sbr.rel (%p292) target = $region40
    $region39: #{attention_layer_forward.1} parent=5 // pred_region
      %s295 = ssub.s32 %s9, 2
      // Predicated region
      $region41: #{attention_layer_forward.1} parent=39 // pred_check
        %p296 = pneg %p122
      $region42: #{attention_layer_forward.1} parent=39 // pred_check_branch
        %298 = sbr.rel (%p296) target = $region44
      $region43: #{attention_layer_forward.1} parent=39 // pred_region
        %s299 = smul.u32 2, %s21
        %p300 = scmp.lt.s32.totalorder %s20, 1
        %s301 = scalar_select %p300, %s20, 1
        %p302 = scmp.lt.s32.totalorder %s299, 1
        %s303 = scalar_select %p302, %s299, 1
        %s304 = smul.addr %s301, 2
        %s305 = sadd.s32 %s303, %s304
        %s306 = smul.addr %s305, 8
        %s307 = scalar_lea.vmem %s3, %s306
      $region44: #{attention_layer_forward.1} parent=39 // pred_fallthru
        _
    $region40: #{attention_layer_forward.1} parent=5 // pred_fallthru
      _
  $region6: #{attention_layer_forward.1} parent=0 // loop_footer
    %s13 = sadd.s32 1, %s9
  $region7: #{attention_layer_forward.1} parent=0 // loop_footer_branch
    %8 = sbr.rel target = $region3
  $region8: #{attention_layer_forward.1} parent=0 // loop_exit
    _

</llo_original>
